<compile_context>
chip_gen: v6e
topology: v6e:2x2x1
jax: 0.10.0
libtpu: 0.0.40
codegen_flags: <defaults>
</compile_context>

<pallas_src>
import jax
import jax.numpy as jnp
from jax.experimental import pallas as pl
from jax.experimental.pallas import tpu as pltpu


def _scalar_kernel(c_ref, o_ref):
    # Pass-through of the scalar parameter (the whole "forward pass").
    # Both refs live in SMEM; this is a single scalar load + store.
    o_ref[0, 0] = c_ref[0, 0]


@jax.jit
def scalar_forward(constant_param: jax.Array) -> jax.Array:
    """Pallas equivalent of Scalar.forward().

    Args:
      constant_param: (1, 1) float32 array (the nn.Parameter, pre-shaped).

    Returns:
      0-d float32 array equal to the parameter.
    """
    out = pl.pallas_call(
        _scalar_kernel,
        out_shape=jax.ShapeDtypeStruct((1, 1), jnp.float32),
        in_specs=[pl.BlockSpec(memory_space=pltpu.SMEM)],
        out_specs=pl.BlockSpec(memory_space=pltpu.SMEM),
    )(constant_param)
    # Present the 0-d scalar the PyTorch module returns; under jit this is a
    # metadata-only reshape fused with the consumer.
    return out.reshape(())


@jax.jit
def scalar_value(constant_param: jax.Array) -> jax.Array:
    """Zero-cost forward (preferred in real training loops): no custom call.

    XLA folds the reshape into the consumer; this is the review's top
    recommendation and is exactly equivalent numerically.
    """
    return constant_param.reshape(())


class Scalar:
    """Minimal JAX mirror of the PyTorch Scalar module."""

    def __init__(self, init_value: float):
        # nn.Parameter(torch.tensor(init_value, dtype=torch.float32)),
        # stored pre-shaped as (1, 1) so no reshapes surround the custom call.
        self.constant = jnp.full((1, 1), init_value, dtype=jnp.float32)

    def __call__(self) -> jax.Array:
        return scalar_forward(self.constant)

    def value(self) -> jax.Array:
        return scalar_value(self.constant)


if __name__ == "__main__":
    # Deterministic "parameter init" derived from PRNGKey(0) (the module's
    # __init__ just stores the given init_value).
    key = jax.random.PRNGKey(0)
    init_value = float(jax.random.uniform(key, (), dtype=jnp.float32))

    module = Scalar(init_value)

    # Pallas-kernel path.
    result = jax.block_until_ready(module())
    # Second call: confirm the parameter buffer is untouched (no aliasing).
    result2 = jax.block_until_ready(module())
    # Kernel-free fast path (review's preferred production path).
    result_fast = jax.block_until_ready(module.value())

    expected = jnp.float32(init_value)
    assert result.shape == (), f"expected 0-d output, got shape {result.shape}"
    assert result.dtype == jnp.float32, f"expected float32, got {result.dtype}"
    assert jnp.allclose(result, expected), (result, expected)
    assert jnp.allclose(result2, expected), (result2, expected)
    assert jnp.allclose(result_fast, expected), (result_fast, expected)

    print("KERNEL_OK")
</pallas_src>

<mosaic_0001>
module attributes {stable_mosaic.version = 11 : i64} {
  func.func @_scalar_kernel(%arg0: memref<1x1xf32, #tpu.memory_space<smem>>, %arg1: memref<1x1xf32, #tpu.memory_space<smem>>) attributes {dimension_semantics = [], scalar_prefetch = 0 : i64, scratch_operands = 0 : i64, tpu.core_type = #tpu.core_type<tc>} {
    %c0 = arith.constant 0 : index
    %c0_0 = arith.constant 0 : index
    %0 = memref.load %arg0[%c0, %c0_0] : memref<1x1xf32, #tpu.memory_space<smem>>
    %c0_1 = arith.constant 0 : index
    %c0_2 = arith.constant 0 : index
    %1 = memref.load %arg1[%c0_1, %c0_2] : memref<1x1xf32, #tpu.memory_space<smem>>
    memref.store %0, %arg1[%c0_1, %c0_2] : memref<1x1xf32, #tpu.memory_space<smem>>
    return
  }
}

</mosaic_0001>

<llo_original>
// kernel: scalar_forward.1
$region0: #{scalar_forward.1}
  #allocation0 [shape = 'u32[]', space=smem, size = 0x4, offset = 0x4, fixed_abs, tag = 'smem constant byte address 0x4 - core index']
  #allocation1 [shape = 'u32[144,128]{1,0:T(1,128)}', space=vmem, size = 0x12000, scoped, tag = 'internal scratch']
  #allocation2 [shape = 'f32[1,1]{1,0:T(1,128)S(6)}', space=smem, size = 0x200, scoped, tag = 'scoped memory for scalar_forward.1']
  %s0 = inlined_call_operand.<no memory space> [shape: f32[1,1], index: 0, kind: input, shape index: {}]
  %s1 = inlined_call_operand.hbm [shape: f32[1,1], index: 1, kind: output, shape index: {}]
  %s2 = sld [smem:[#allocation0]]
  $region14: #{scalar_forward.1} parent=0
    _
  %s4 = ssub.s32 1, %s2
  %s5 = scalar_select 0, %s4, %s2
  %6 = sst [smem:[#allocation2]] %s0
  $region1: #{scalar_forward.1} parent=0
    #allocation3 [shape = 'u8[512]{0}', space=smem, size = 0x200, scoped, tag = 'output window, operand 0, single buffered']
    #allocation4 [shape = 's32[1]{0}', space=sflag, size = 0x4, scoped, tag = 'scoped memory for scalar_forward.1']
    %7 = vsyncpa [#allocation4], 0
    // Predicated region
    $region2: #{scalar_forward.1} parent=1 // pred_check
      _
    $region3: #{scalar_forward.1} parent=1 // pred_check_branch
      %9 = sbr.rel (0) target = $region5
    $region4: #{scalar_forward.1} parent=1 // pred_region
      _
    $region5: #{scalar_forward.1} parent=1 // pred_fallthru
      _
    %s10 = sld [smem:[#allocation2]]
    %s11 = scalar_lea.smem [#allocation3], 0
    %12 = sst [smem:[%s11]] %s10
    // Predicated region
    $region6: #{scalar_forward.1} parent=1 // pred_check
      _
    $region7: #{scalar_forward.1} parent=1 // pred_check_branch
      %14 = sbr.rel (0) target = $region9
    $region8: #{scalar_forward.1} parent=1 // pred_region
      %s16 = ssub.s32 16, 16
      %17 = vsyncadd [#allocation4], %s16
      %20 = dma.smem_to_hbm [#allocation3], 16, %s1, [#allocation4]
    $region9: #{scalar_forward.1} parent=1 // pred_fallthru
      _
    // Predicated region
    $region10: #{scalar_forward.1} parent=1 // pred_check
      _
    $region11: #{scalar_forward.1} parent=1 // pred_check_branch
      %22 = sbr.rel (0) target = $region13
    $region12: #{scalar_forward.1} parent=1 // pred_region
      %23 = dma.done [#allocation4], 16
    $region13: #{scalar_forward.1} parent=1 // pred_fallthru
      _
    %24 = sfence
    %25 = vsyncpa [#allocation4], 1

</llo_original>
